<compile_context>
chip_gen: v6e
topology: v6e:2x2x1
jax: 0.10.0
libtpu: 0.0.40
codegen_flags: <defaults>
</compile_context>

<pallas_src>
import jax
import jax.numpy as jnp
from jax.experimental import pallas as pl
from jax.experimental.pallas import tpu as pltpu


VMEM_LIMIT = 48 * 1024 * 1024  # safe on v7x (64 MiB/TC) and generous on v5e/v6e (128 MiB)


def _round_up(x, m):
    return ((x + m - 1) // m) * m


# ----------------------------- Tiled linear kernel (x @ W + b) ----------------------------- #
def linear_kernel(x_ref, w_ref, b_ref, o_ref):
    # Cast activations to the (bf16) weight dtype inside the kernel (free under the MXU op).
    x = x_ref[...].astype(w_ref.dtype)
    acc = jnp.dot(x, w_ref[...], preferred_element_type=jnp.float32)
    o_ref[...] = (acc + b_ref[...].astype(jnp.float32)).astype(o_ref.dtype)


def linear_forward(x, w_t, b, *, out_dtype=jnp.float32, tm=512, tn=512,
                   vmem_limit_bytes=VMEM_LIMIT):
    """x: (M, K); w_t: (K, N) bf16; b: (1, N) -> (M, N). Tiled over rows/cols, full K per tile."""
    M, K = x.shape
    Kw, N = w_t.shape
    assert K == Kw
    tm = min(tm, M)
    tn = min(tn, N)
    grid = (pl.cdiv(M, tm), pl.cdiv(N, tn))
    return pl.pallas_call(
        linear_kernel,
        out_shape=jax.ShapeDtypeStruct((M, N), out_dtype),
        grid_spec=pltpu.PrefetchScalarGridSpec(
            num_scalar_prefetch=0,
            grid=grid,
            in_specs=[
                pl.BlockSpec((tm, K), lambda i, j: (i, 0)),
                pl.BlockSpec((K, tn), lambda i, j: (0, j)),
                pl.BlockSpec((1, tn), lambda i, j: (0, j)),
            ],
            out_specs=pl.BlockSpec((tm, tn), lambda i, j: (i, j)),
        ),
        compiler_params=pltpu.CompilerParams(
            dimension_semantics=("parallel", "parallel"),
            vmem_limit_bytes=vmem_limit_bytes,
        ),
    )(x, w_t, b)


# ----------------------------- Input projection (gate-major output) ----------------------------- #
def input_proj_kernel(x_ref, w_ref, b_ref, o_ref):
    # x: (tm, I) bf16; w: (1, I, H) bf16; b: (1, 1, H) f32; o: (1, tm, H) bf16
    acc = jnp.dot(x_ref[...], w_ref[0], preferred_element_type=jnp.float32)
    o_ref[0] = (acc + b_ref[0]).astype(o_ref.dtype)


def input_proj_forward(x, w_ih, b_ih, *, out_dtype=jnp.bfloat16, tm=256,
                       vmem_limit_bytes=VMEM_LIMIT):
    """x: (M, I) bf16; w_ih: (3, I, H_pad) bf16; b_ih: (3, 1, H_pad) f32 -> (3, M, H_pad) bf16.

    Gate axis is the leading (outer) output dim so each gate slab is a dense (rows, H_pad)
    sublane/lane tile.  Grid order (row-tile, gate) keeps the x tile resident across gates.
    """
    M, I = x.shape
    three, Iw, H = w_ih.shape
    assert three == 3 and Iw == I
    tm = min(tm, M)
    grid = (pl.cdiv(M, tm), 3)
    return pl.pallas_call(
        input_proj_kernel,
        out_shape=jax.ShapeDtypeStruct((3, M, H), out_dtype),
        grid_spec=pltpu.PrefetchScalarGridSpec(
            num_scalar_prefetch=0,
            grid=grid,
            in_specs=[
                pl.BlockSpec((tm, I), lambda i, g: (i, 0)),
                pl.BlockSpec((1, I, H), lambda i, g: (g, 0, 0)),
                pl.BlockSpec((1, 1, H), lambda i, g: (g, 0, 0)),
            ],
            out_specs=pl.BlockSpec((1, tm, H), lambda i, g: (g, i, 0)),
        ),
        compiler_params=pltpu.CompilerParams(
            dimension_semantics=("parallel", "parallel"),
            vmem_limit_bytes=vmem_limit_bytes,
        ),
    )(x, w_ih, b_ih)


# ----------------------------- GRU recurrence kernel ----------------------------- #
def gru_kernel(gx_ref, whh_ref, bhn_ref, h0_ref, out_ref, h_scratch):
    """Grid = (batch_shard [parallel], time_chunk [arbitrary]).

    gx_ref : (3, TS, B, H) bf16  gate-major precomputed input projections (+ folded biases)
    whh_ref: (H, 3H)       bf16  fused hidden weights, column blocks [r | z | n]
    bhn_ref: (1, H)        f32   hidden bias of the n gate only
    h0_ref : (B, H)        f32   initial hidden for this batch shard
    out_ref: (TS, B, H)    f32   per-step outputs for this (shard, chunk)
    """
    c = pl.program_id(1)

    @pl.when(c == 0)
    def _():
        h_scratch[...] = h0_ref[...]

    TS = gx_ref.shape[1]
    B = h0_ref.shape[0]
    H = whh_ref.shape[0]

    # Hoisted out of the serial loop: fused hidden weight, broadcast n-gate bias,
    # and static per-gate ref views (gate dim is leading -> dense (B,H) tiles).
    whh = whh_ref[...]                                                   # (H, 3H) bf16
    bhn = jnp.broadcast_to(bhn_ref[...].astype(jnp.float32), (B, H))
    gx_r_ref = gx_ref.at[0]
    gx_z_ref = gx_ref.at[1]
    gx_n_ref = gx_ref.at[2]

    def step(t, h):
        gx_r = gx_r_ref[t].astype(jnp.float32)                           # (B, H)
        gx_z = gx_z_ref[t].astype(jnp.float32)
        gx_n = gx_n_ref[t].astype(jnp.float32)
        hb = h.astype(whh.dtype)                                         # bf16 MXU operand
        gh = jnp.dot(hb, whh, preferred_element_type=jnp.float32)        # (B, 3H), one matmul
        gh_r = gh[:, :H]                                                 # lane-aligned slices
        gh_z = gh[:, H:2 * H]
        gh_n = gh[:, 2 * H:]
        # PyTorch GRU semantics; b_ir+b_hr and b_iz+b_hz already folded into gx_r/gx_z.
        r = jax.nn.sigmoid(gx_r + gh_r)
        z = jax.nn.sigmoid(gx_z + gh_z)
        n = jnp.tanh(gx_n + r * (gh_n + bhn))
        h_new = (1.0 - z) * n + z * h
        out_ref[t] = h_new.astype(out_ref.dtype)
        return h_new

    unroll = TS if TS <= 8 else 4
    h_final = jax.lax.fori_loop(0, TS, step, h_scratch[...], unroll=unroll)
    h_scratch[...] = h_final


def gru_forward(gx, w_hh, b_hn, h0, *, time_chunk=None, batch_shards=None,
                vmem_limit_bytes=VMEM_LIMIT):
    """gx: (3, S, B_pad, H_pad) bf16; w_hh: (H_pad, 3*H_pad) bf16; b_hn: (1, H_pad) f32;
    h0: (B_pad, H_pad) f32.  Returns per-step outputs (S, B_pad, H_pad) f32."""
    three, S, B, H = gx.shape
    assert three == 3

    # Batch shards: split the batch across TensorCores on v7x (2 TCs); keep each shard a
    # sublane multiple of 8.  No effect on v5e/v6e (1 TC), just a slightly finer grid.
    if batch_shards is None:
        batch_shards = 2 if (B % 16 == 0) else 1
    assert B % batch_shards == 0
    Bs = B // batch_shards

    # Derive the time chunk from a VMEM budget:
    #   2 * (gx_chunk + out_chunk) + 2*W_hh + h0/h_scratch + slack <= vmem_limit
    if time_chunk is None:
        fixed = (2 * w_hh.size * w_hh.dtype.itemsize        # double-buffered W_hh
                 + 3 * Bs * H * 4                            # h0 (x2) + h_scratch
                 + (1 << 20))                                # slack
        per_ts = 2 * (3 * Bs * H * gx.dtype.itemsize + Bs * H * 4)   # db'ed gx + out per step
        cap = max(1, (vmem_limit_bytes - fixed) // per_ts)
        ts = min(S, int(cap))
        while S % ts:                                        # largest divisor of S <= cap
            ts -= 1
        time_chunk = ts
    TS = time_chunk
    assert S % TS == 0
    num_chunks = S // TS

    grid_spec = pltpu.PrefetchScalarGridSpec(
        num_scalar_prefetch=0,
        grid=(batch_shards, num_chunks),
        in_specs=[
            pl.BlockSpec((3, TS, Bs, H), lambda b, c: (0, c, b, 0)),
            pl.BlockSpec((H, 3 * H), lambda b, c: (0, 0)),
            pl.BlockSpec((1, H), lambda b, c: (0, 0)),
            pl.BlockSpec((Bs, H), lambda b, c: (b, 0)),
        ],
        out_specs=pl.BlockSpec((TS, Bs, H), lambda b, c: (c, b, 0)),
        scratch_shapes=[pltpu.VMEM((Bs, H), jnp.float32)],
    )
    return pl.pallas_call(
        gru_kernel,
        out_shape=jax.ShapeDtypeStruct((S, B, H), jnp.float32),
        grid_spec=grid_spec,
        compiler_params=pltpu.CompilerParams(
            dimension_semantics=("parallel", "arbitrary"),
            vmem_limit_bytes=vmem_limit_bytes,
        ),
    )(gx, w_hh, b_hn, h0)


# ----------------------------- Full model wrapper ----------------------------- #
def gru4rec_forward(params, input_ids, hidden, *, time_chunk=None, batch_shards=None):
    """input_ids: (S, B) int32; hidden: (nlayers=1, B, H). Returns (decoded, hidden)."""
    S, B = input_ids.shape
    H = params["H"]
    H_pad = params["H_pad"]

    # Embedding lookup (gather) — glue in plain JAX; table stored bf16.
    emb = params["encoder_weight"][input_ids]                     # (S, B, I) bf16
    # Dropout p=0.1: eval-mode identity (deterministic).
    # TODO(synk): training-mode dropout with PRNG not implemented (forward uses eval semantics).

    # Pad batch to a sublane multiple of 8; hidden width padded to a lane multiple of 128.
    B_pad = max(8, _round_up(B, 8))
    if B_pad != B:
        emb = jnp.pad(emb, ((0, 0), (0, B_pad - B), (0, 0)))
    h0 = jnp.pad(hidden[0].astype(jnp.float32), ((0, B_pad - B), (0, H_pad - H)))
    I = emb.shape[-1]

    # 1) Input projection hoisted out of the recurrence; gate-major bf16 output,
    #    b_ih (with b_hr/b_hz folded in) added here.
    gx = input_proj_forward(emb.reshape(S * B_pad, I),
                            params["w_ih"], params["b_ih"])       # (3, S*B_pad, H_pad) bf16
    gx = gx.reshape(3, S, B_pad, H_pad)

    # 2) Serial recurrence: one fused hidden matmul + gate elementwise per step.
    out = gru_forward(gx, params["w_hh"], params["b_hn"], h0,
                      time_chunk=time_chunk, batch_shards=batch_shards)  # (S, B_pad, H_pad) f32

    # Final hidden state == last per-step output (nlayers=1).
    h_final = out[S - 1, :B, :H][None]                            # (1, B, H)

    # 3) Decoder: tiled linear over all (S*B) rows; decoder rows for padded H are zero,
    #    so the (S*B, H_pad) features can be fed directly (cast to bf16 inside the kernel).
    feats = out[:, :B, :].reshape(S * B, H_pad)
    decoded = linear_forward(feats, params["dec_w_t"], params["dec_b"],
                             out_dtype=jnp.float32)               # (S*B, nitem)
    return decoded, h_final


# ----------------------------- Parameters ----------------------------- #
def init_torch_params(key, nitem, ninp, nhid):
    """PyTorch-layout parameters (gate order [r, z, n]), matching GRU4rec defaults."""
    ks = jax.random.split(key, 6)
    initrange = 0.1
    stdv = 1.0 / float(nhid) ** 0.5
    u = lambda k, shape, lo, hi: jax.random.uniform(k, shape, jnp.float32, lo, hi)
    return {
        "encoder.weight": u(ks[0], (nitem, ninp), -initrange, initrange),   # init_weight()
        "gru.weight_ih_l0": u(ks[1], (3 * nhid, ninp), -stdv, stdv),
        "gru.weight_hh_l0": u(ks[2], (3 * nhid, nhid), -stdv, stdv),
        "gru.bias_ih_l0": u(ks[3], (3 * nhid,), -stdv, stdv),
        "gru.bias_hh_l0": u(ks[4], (3 * nhid,), -stdv, stdv),
        "decoder.weight": u(ks[5], (nitem, nhid), -initrange, initrange),   # init_weight()
        "decoder.bias": jnp.zeros((nitem,), jnp.float32),                   # init_weight()
    }


def prepare_params(tp, nhid):
    """Convert PyTorch-layout params to padded, kernel-friendly layouts.

    * H padded to a multiple of 128 (lane-dense gates / outputs).
    * Input weights per-gate (3, I, H_pad), transposed; b_hr/b_hz folded into b_ih.
    * Hidden weights fused into one (H_pad, 3*H_pad) matrix, column blocks [r | z | n].
    * Padded hidden columns stay exactly zero through the recurrence (zero-padded weights
      and biases), and zero-padded decoder rows make the decoder exact.
    """
    H = nhid
    H_pad = _round_up(H, 128)
    I = tp["gru.weight_ih_l0"].shape[1]

    def gate(x, g):
        return x[g * H:(g + 1) * H]

    w_ih = tp["gru.weight_ih_l0"]            # (3H, I)
    w_hh = tp["gru.weight_hh_l0"]            # (3H, H)
    b_ih = tp["gru.bias_ih_l0"]              # (3H,)
    b_hh = tp["gru.bias_hh_l0"]              # (3H,)

    # Per-gate input weights, transposed to (I, H) and padded to (I, H_pad).
    w_ih_g = jnp.stack([jnp.pad(gate(w_ih, g).T, ((0, 0), (0, H_pad - H)))
                        for g in range(3)])                                   # (3, I, H_pad)
    # Folded input biases: r,z get b_ih+b_hh; n keeps only b_in (b_hn stays in-kernel).
    b_r = gate(b_ih, 0) + gate(b_hh, 0)
    b_z = gate(b_ih, 1) + gate(b_hh, 1)
    b_n = gate(b_ih, 2)
    b_ih_eff = jnp.stack([jnp.pad(b, (0, H_pad - H))[None, :]
                          for b in (b_r, b_z, b_n)])                          # (3, 1, H_pad)

    # Fused hidden weights: each gate transposed to (H, H), padded to (H_pad, H_pad), concat cols.
    whh_blocks = [jnp.pad(gate(w_hh, g).T, ((0, H_pad - H), (0, H_pad - H))) for g in range(3)]
    w_hh_cat = jnp.concatenate(whh_blocks, axis=1)                            # (H_pad, 3*H_pad)
    b_hn = jnp.pad(gate(b_hh, 2), (0, H_pad - H))[None, :]                    # (1, H_pad)

    dec_w_t = jnp.pad(tp["decoder.weight"].T, ((0, H_pad - H), (0, 0)))       # (H_pad, nitem)
    dec_b = tp["decoder.bias"][None, :]                                       # (1, nitem)

    return {
        "encoder_weight": tp["encoder.weight"].astype(jnp.bfloat16),
        "w_ih": w_ih_g.astype(jnp.bfloat16),
        "b_ih": b_ih_eff.astype(jnp.float32),
        "w_hh": w_hh_cat.astype(jnp.bfloat16),
        "b_hn": b_hn.astype(jnp.float32),
        "dec_w_t": dec_w_t.astype(jnp.bfloat16),
        "dec_b": dec_b.astype(jnp.float32),
        "H": H,
        "H_pad": H_pad,
    }


if __name__ == "__main__":
    nitem, ninp, nhid, nlayers = 64, 32, 32, 1
    seq_len, batch = 8, 2

    key = jax.random.PRNGKey(0)
    pkey, ikey = jax.random.split(key)
    torch_params = init_torch_params(pkey, nitem, ninp, nhid)
    params = prepare_params(torch_params, nhid)

    input_ids = jax.random.randint(ikey, (seq_len, batch), 0, nitem, dtype=jnp.int32)
    hidden0 = jnp.zeros((nlayers, batch, nhid), jnp.float32)   # init_hidden(bsz)

    decoded, hidden = gru4rec_forward(params, input_ids, hidden0)
    jax.block_until_ready((decoded, hidden))

    assert decoded.shape == (seq_len * batch, nitem)
    assert hidden.shape == (nlayers, batch, nhid)
    print("KERNEL_OK")
</pallas_src>

<mosaic_0001>
module attributes {stable_mosaic.version = 11 : i64} {
  func.func @input_proj_kernel(%arg0: i32, %arg1: i32, %arg2: memref<64x32xbf16, #tpu.memory_space<vmem>>, %arg3: memref<1x32x128xbf16, #tpu.memory_space<vmem>>, %arg4: memref<1x1x128xf32, #tpu.memory_space<vmem>>, %arg5: memref<1x64x128xbf16, #tpu.memory_space<vmem>>) attributes {dimension_semantics = [#tpu.dimension_semantics<parallel>, #tpu.dimension_semantics<parallel>], iteration_bounds = array<i64: 1, 3>, scalar_prefetch = 0 : i64, scratch_operands = 0 : i64, tpu.core_type = #tpu.core_type<tc>, window_params = [{transform_indices = @transform_0, window_bounds = array<i64: 64, 32>}, {transform_indices = @transform_1, window_bounds = array<i64: 1, 32, 128>}, {transform_indices = @transform_2, window_bounds = array<i64: 1, 1, 128>}, {transform_indices = @transform_3, window_bounds = array<i64: 1, 64, 128>}]} {
    %c0 = arith.constant 0 : index
    %c0_0 = arith.constant 0 : index
    %0 = vector.load %arg2[%c0, %c0_0] : memref<64x32xbf16, #tpu.memory_space<vmem>>, vector<64x32xbf16>
    %c0_1 = arith.constant 0 : index
    %c0_2 = arith.constant 0 : index
    %c0_3 = arith.constant 0 : index
    %1 = vector.load %arg3[%c0_1, %c0_2, %c0_3] : memref<1x32x128xbf16, #tpu.memory_space<vmem>>, vector<1x32x128xbf16>
    %2 = vector.shape_cast %1 : vector<1x32x128xbf16> to vector<32x128xbf16>
    %cst = arith.constant dense<0.000000e+00> : vector<64x128xf32>
    %3 = tpu.matmul %0, %2, %cst {dimension_numbers = #tpu.dot_dimension_numbers<[1], [0], [0], [1], [0, 0, 1, 1], [], []>} : vector<64x32xbf16>, vector<32x128xbf16>, vector<64x128xf32> -> vector<64x128xf32>
    %c0_4 = arith.constant 0 : index
    %c0_5 = arith.constant 0 : index
    %c0_6 = arith.constant 0 : index
    %4 = vector.load %arg4[%c0_4, %c0_5, %c0_6] : memref<1x1x128xf32, #tpu.memory_space<vmem>>, vector<1x1x128xf32>
    %5 = vector.shape_cast %4 : vector<1x1x128xf32> to vector<1x128xf32>
    %6 = vector.broadcast %5 : vector<1x128xf32> to vector<64x128xf32>
    %7 = arith.addf %3, %6 : vector<64x128xf32>
    %8 = arith.truncf %7 : vector<64x128xf32> to vector<64x128xbf16>
    %c0_7 = arith.constant 0 : index
    %c0_8 = arith.constant 0 : index
    %c0_9 = arith.constant 0 : index
    %9 = vector.load %arg5[%c0_7, %c0_8, %c0_9] : memref<1x64x128xbf16, #tpu.memory_space<vmem>>, vector<1x64x128xbf16>
    %10 = vector.shape_cast %9 : vector<1x64x128xbf16> to vector<64x128xbf16>
    %11 = vector.shape_cast %8 : vector<64x128xbf16> to vector<1x64x128xbf16>
    tpu.vector_store %arg5[%c0_7, %c0_8, %c0_9], %11 {strides = array<i32>} : memref<1x64x128xbf16, #tpu.memory_space<vmem>>, vector<1x64x128xbf16>,
    return
  }
  func.func @transform_0(%arg0: i32, %arg1: i32) -> (i32, i32) {
    %c0_i32 = arith.constant 0 : i32
    %c0_i32_0 = arith.constant 0 : i32
    return %arg0, %c0_i32 : i32, i32
  }
  func.func @transform_1(%arg0: i32, %arg1: i32) -> (i32, i32, i32) {
    %c0_i32 = arith.constant 0 : i32
    %c0_i32_0 = arith.constant 0 : i32
    %c0_i32_1 = arith.constant 0 : i32
    return %arg1, %c0_i32, %c0_i32_0 : i32, i32, i32
  }
  func.func @transform_2(%arg0: i32, %arg1: i32) -> (i32, i32, i32) {
    %c0_i32 = arith.constant 0 : i32
    %c0_i32_0 = arith.constant 0 : i32
    %c0_i32_1 = arith.constant 0 : i32
    return %arg1, %c0_i32, %c0_i32_0 : i32, i32, i32
  }
  func.func @transform_3(%arg0: i32, %arg1: i32) -> (i32, i32, i32) {
    %c0_i32 = arith.constant 0 : i32
    %c0_i32_0 = arith.constant 0 : i32
    return %arg1, %arg0, %c0_i32 : i32, i32, i32
  }
}

</mosaic_0001>

<llo_original>
// kernel: tpu_custom_call.1
$region0: #{tpu_custom_call.1}
  #allocation0 [shape = 'u32[]', space=smem, size = 0x4, offset = 0x4, fixed_abs, tag = 'smem constant byte address 0x4 - core index']
  #allocation1 [shape = 'u32[144,128]{1,0:T(1,128)}', space=vmem, size = 0x12000, scoped, tag = 'internal scratch']
  %s0 = inlined_call_operand.vmem [shape: bf16[64,32], index: 0, kind: input, shape index: {}]
  %s1 = inlined_call_operand.vmem [shape: bf16[3,32,128], index: 1, kind: input, shape index: {}]
  %s2 = inlined_call_operand.vmem [shape: f32[3,1,128], index: 2, kind: input, shape index: {}]
  %s3 = inlined_call_operand.hbm [shape: bf16[3,64,128], index: 3, kind: output, shape index: {}]
  %s4 = sld [smem:[#allocation0]]
  $region45: #{tpu_custom_call.1} parent=0
    _
  %s6 = ssub.s32 1, %s4
  %s7 = scalar_select 0, %s6, %s4
  $region1: #{tpu_custom_call.1} parent=0
    #allocation2 [shape = 'u8[32768]{0}', space=vmem, size = 0x8000, scoped, tag = 'output window, operand 0']
    #allocation3 [shape = 's32[2]{0}', space=sflag, size = 0x8, scoped, tag = 'scoped memory for tpu_custom_call.1']
    %8 = vsyncpa [#allocation3], 0
    %s9 = scalar_lea.sflag [#allocation3], 1
    %10 = vsyncpa %s9, 0
    loop: start=0, step=1, limit=5
    $region2: #{tpu_custom_call.1} parent=1 // loop_pre_header
      _
    $region3: #{tpu_custom_call.1} parent=1 // loop_header
      %s12 = sphi 0, %s16
      %p13 = scmp.ge.s32.totalorder %s12, 5
      %s19 = sphi 0, %s31
      %s20 = sphi 0, %s27
      %s21 = sphi 0, %s19
      %s22 = sphi 0, %s20
      %s23 = sphi 0, %s21
      %s24 = sphi 0, %s22
      %s34 = sphi 0, %s36
      %s37 = sphi 0, %s34
      %s38 = sphi 0, %s37
      %s54 = sphi 0, %s38
      %s60 = sphi 0, %s62
      %s63 = sphi 0, %s60
      %s64 = sphi 0, %s63
      %s80 = sphi 0, %s64
      %s86 = sphi 0, %s88
      %s89 = sphi 0, %s86
      %s90 = sphi 0, %s89
      %s106 = sphi 0, %s90
      %s114 = sphi 0, %s116
      %s117 = sphi 0, %s114
      %s118 = sphi 0, %s117
      %s134 = sphi 0, %s118
    $region4: #{tpu_custom_call.1} parent=1 // loop_header_branch
      %15 = sbr.rel (%p13) target = $region8
    $region5: #{tpu_custom_call.1} parent=1 // loop_body
      %s17 = ssub.s32 %s12, 1
      %s18 = ssub.s32 %s12, 2
      %s25 = sadd.s32 1, %s20
      %p26 = scmp.ge.s32.totalorder %s25, 3
      %s27 = scalar_select %p26, 0, %s25
      %s28 = sadd.s32 1, %s19
      %s29 = scalar_select %p26, %s28, %s19
      %p30 = scmp.ge.s32.totalorder %s29, 1
      %s31 = scalar_select %p30, 0, %s29
      %s32 = ssub.s32 %s19, %s31
      %p33 = scmp.eq.s32.totalorder %s32, 0
      %s35 = sadd.s32 %s34, 1
      %s36 = scalar_select %p33, %s34, %s35
      %p39 = pneg %p33
      %p40 = scmp.eq.s32.totalorder %s12, 2
      %p41 = por %p39, %p40
      %p42 = scmp.ne.s32.totalorder %s34, %s37
      %p43 = scmp.eq.s32.totalorder %s12, 0
      %p44 = por %p42, %p43
      %p45 = scmp.ne.s32.totalorder %s34, %s37
      %p46 = scmp.eq.s32.totalorder %s17, 2
      %p47 = por %p45, %p46
      %p48 = scmp.ne.s32.totalorder %s37, %s38
      %p49 = scmp.eq.s32.totalorder %s17, 0
      %p50 = por %p48, %p49
      %p51 = scmp.ne.s32.totalorder %s37, %s38
      %p52 = scmp.eq.s32.totalorder %s18, 2
      %p53 = por %p51, %p52
      %p55 = scmp.ne.s32.totalorder %s38, %s54
      %p56 = scmp.eq.s32.totalorder %s18, 0
      %p57 = por %p55, %p56
      %s58 = ssub.s32 %s20, %s27
      %p59 = scmp.eq.s32.totalorder %s58, 0
      %s61 = sadd.s32 %s60, 1
      %s62 = scalar_select %p59, %s60, %s61
      %p65 = pneg %p59
      %p66 = scmp.eq.s32.totalorder %s12, 2
      %p67 = por %p65, %p66
      %p68 = scmp.ne.s32.totalorder %s60, %s63
      %p69 = scmp.eq.s32.totalorder %s12, 0
      %p70 = por %p68, %p69
      %p71 = scmp.ne.s32.totalorder %s60, %s63
      %p72 = scmp.eq.s32.totalorder %s17, 2
      %p73 = por %p71, %p72
      %p74 = scmp.ne.s32.totalorder %s63, %s64
      %p75 = scmp.eq.s32.totalorder %s17, 0
      %p76 = por %p74, %p75
      %p77 = scmp.ne.s32.totalorder %s63, %s64
      %p78 = scmp.eq.s32.totalorder %s18, 2
      %p79 = por %p77, %p78
      %p81 = scmp.ne.s32.totalorder %s64, %s80
      %p82 = scmp.eq.s32.totalorder %s18, 0
      %p83 = por %p81, %p82
      %s84 = ssub.s32 %s20, %s27
      %p85 = scmp.eq.s32.totalorder %s84, 0
      %s87 = sadd.s32 %s86, 1
      %s88 = scalar_select %p85, %s86, %s87
      %p91 = pneg %p85
      %p92 = scmp.eq.s32.totalorder %s12, 2
      %p93 = por %p91, %p92
      %p94 = scmp.ne.s32.totalorder %s86, %s89
      %p95 = scmp.eq.s32.totalorder %s12, 0
      %p96 = por %p94, %p95
      %p97 = scmp.ne.s32.totalorder %s86, %s89
      %p98 = scmp.eq.s32.totalorder %s17, 2
      %p99 = por %p97, %p98
      %p100 = scmp.ne.s32.totalorder %s89, %s90
      %p101 = scmp.eq.s32.totalorder %s17, 0
      %p102 = por %p100, %p101
      %p103 = scmp.ne.s32.totalorder %s89, %s90
      %p104 = scmp.eq.s32.totalorder %s18, 2
      %p105 = por %p103, %p104
      %p107 = scmp.ne.s32.totalorder %s90, %s106
      %p108 = scmp.eq.s32.totalorder %s18, 0
      %p109 = por %p107, %p108
      %s110 = ssub.s32 %s20, %s27
      %s111 = ssub.s32 %s19, %s31
      %s112 = sor.u32 %s110, %s111
      %p113 = scmp.eq.s32.totalorder %s112, 0
      %s115 = sadd.s32 %s114, 1
      %s116 = scalar_select %p113, %s114, %s115
      %p119 = pneg %p113
      %p120 = scmp.eq.s32.totalorder %s12, 2
      %p121 = por %p119, %p120
      %p122 = scmp.ne.s32.totalorder %s114, %s117
      %p123 = scmp.eq.s32.totalorder %s12, 0
      %p124 = por %p122, %p123
      %p125 = scmp.ne.s32.totalorder %s114, %s117
      %p126 = scmp.eq.s32.totalorder %s17, 2
      %p127 = por %p125, %p126
      %p128 = scmp.ne.s32.totalorder %s117, %s118
      %p129 = scmp.eq.s32.totalorder %s17, 0
      %p130 = por %p128, %p129
      %p131 = scmp.ne.s32.totalorder %s117, %s118
      %p132 = scmp.eq.s32.totalorder %s18, 2
      %p133 = por %p131, %p132
      %p135 = scmp.ne.s32.totalorder %s118, %s134
      %p136 = scmp.eq.s32.totalorder %s18, 0
      %p137 = por %p135, %p136
      %p138 = scmp.le.s32.totalorder 1, %s12
      %p139 = scmp.lt.s32.totalorder %s12, 4
      %p140 = pnand %p138, %p139
      %p141 = pneg %p140
      // Predicated region
      $region9: #{tpu_custom_call.1} parent=5 // pred_check
        _
      $region10: #{tpu_custom_call.1} parent=5 // pred_check_branch
        %143 = sbr.rel (%p140) target = $region12
      $region11: #{tpu_custom_call.1} parent=5 // pred_region
        %s144 = ssub.s32 %s12, 1
        // Predicated region
        $region13: #{tpu_custom_call.1} parent=11 // pred_check
          %p145 = pneg %p50
        $region14: #{tpu_custom_call.1} parent=11 // pred_check_branch
          %147 = sbr.rel (%p145) target = $region16
        $region15: #{tpu_custom_call.1} parent=11 // pred_region
          %s148 = smul.u32 8, %s21
          %p149 = scmp.lt.s32.totalorder %s148, 7
          %s150 = scalar_select %p149, %s148, 7
          %s151 = smul.addr %s150, 4
          %s152 = scalar_lea.vmem %s0, %s151
          %s153 = smul.u32 8, %s21
        $region16: #{tpu_custom_call.1} parent=11 // pred_fallthru
          _
      $region12: #{tpu_custom_call.1} parent=5 // pred_fallthru
        _
      %p154 = scmp.lt.s32.totalorder %s12, 3
      // Predicated region
      $region17: #{tpu_custom_call.1} parent=5 // pred_check
        %p155 = pneg %p154
      $region18: #{tpu_custom_call.1} parent=5 // pred_check_branch
        %157 = sbr.rel (%p155) target = $region20
      $region19: #{tpu_custom_call.1} parent=5 // pred_region
        // Predicated region
        $region21: #{tpu_custom_call.1} parent=19 // pred_check
          %p158 = pneg %p70
        $region22: #{tpu_custom_call.1} parent=19 // pred_check_branch
          %160 = sbr.rel (%p158) target = $region24
        $region23: #{tpu_custom_call.1} parent=19 // pred_region
          %p161 = scmp.lt.s32.totalorder %s20, 2
          %s162 = scalar_select %p161, %s20, 2
          %s163 = smul.addr %s162, 4
          %s164 = smul.addr %s163, 4
          %s165 = scalar_lea.vmem %s1, %s164
        $region24: #{tpu_custom_call.1} parent=19 // pred_fallthru
          _
        // Predicated region
        $region25: #{tpu_custom_call.1} parent=19 // pred_check
          %p166 = pneg %p96
        $region26: #{tpu_custom_call.1} parent=19 // pred_check_branch
          %168 = sbr.rel (%p166) target = $region28
        $region27: #{tpu_custom_call.1} parent=19 // pred_region
          %p169 = scmp.lt.s32.totalorder %s20, 2
          %s170 = scalar_select %p169, %s20, 2
          %s171 = scalar_lea.vmem %s2, %s170
        $region28: #{tpu_custom_call.1} parent=19 // pred_fallthru
          _
      $region20: #{tpu_custom_call.1} parent=5 // pred_fallthru
        _
      %p172 = scmp.le.s32.totalorder 1, %s12
      %p173 = scmp.lt.s32.totalorder %s12, 4
      %p174 = pnand %p172, %p173
      %p175 = pneg %p174
      // Predicated region
      $region29: #{tpu_custom_call.1} parent=5 // pred_check
        _
      $region30: #{tpu_custom_call.1} parent=5 // pred_check_branch
        %177 = sbr.rel (%p174) target = $region32
      $region31: #{tpu_custom_call.1} parent=5 // pred_region
        %s178 = ssub.s32 %s12, 1
        %s179 = smul.u32 8, %s21
        %p180 = scmp.lt.s32.totalorder %s179, 7
        %s181 = scalar_select %p180, %s179, 7
        %s182 = smul.addr %s181, 4
        %s183 = scalar_lea.vmem %s0, %s182
        %p184 = pneg %p50
        %p185 = pneg %p47
        %p186 = scmp.lt.s32.totalorder %s22, 2
        %s187 = scalar_select %p186, %s22, 2
        %s188 = smul.addr %s187, 4
        %s189 = smul.addr %s188, 4
        %s190 = scalar_lea.vmem %s1, %s189
        %p191 = pneg %p76
        %p192 = pneg %p73
        %p193 = scmp.lt.s32.totalorder %s22, 2
        %s194 = scalar_select %p193, %s22, 2
        %s195 = scalar_lea.vmem %s2, %s194
        %p196 = pneg %p102
        %p197 = pneg %p99
        %p198 = pneg %p130
        %p199 = pneg %p127
        %s200 = sand.u32 %s117, 1
        %s201 = scalar_lea.sflag [#allocation3], %s200
        %s202 = sand.u32 %s117, 1
        %s203 = smul.addr %s202, 32
        %s204 = scalar_lea.vmem [#allocation2], %s203
        %s205 = smul.u32 8, %s21
        %p206 = scmp.lt.s32.totalorder %s205, 7
        %s207 = scalar_select %p206, %s205, 7
        %s208 = smul.addr %s207, 4
        %s209 = scalar_lea.vmem %s0, %s208
        %s210 = smul.u32 8, %s21
        %p211 = scmp.lt.s32.totalorder %s22, 2
        %s212 = scalar_select %p211, %s22, 2
        %s213 = smul.addr %s212, 4
        %s214 = smul.addr %s213, 4
        %s215 = scalar_lea.vmem %s1, %s214
        %p216 = scmp.lt.s32.totalorder %s22, 2
        %s217 = scalar_select %p216, %s22, 2
        %s218 = scalar_lea.vmem %s2, %s217
        %s219 = smul.u32 8, %s21
        %v221 = vld [vmem:[%s209] sm:$0xf]
        %v222 = vld [vmem:[%s209 + $0x4] sm:$0xf]
        %v223 = vld [vmem:[%s209 + $0x8] sm:$0xf]
        %v224 = vld [vmem:[%s209 + $0xc] sm:$0xf]
        %v225 = vld [vmem:[%s209 + $0x10] sm:$0xf]
        %v226 = vld [vmem:[%s209 + $0x14] sm:$0xf]
        %v227 = vld [vmem:[%s209 + $0x18] sm:$0xf]
        %v228 = vld [vmem:[%s209 + $0x1c] sm:$0xf]
        %v229 = vld [vmem:[%s215] sm:$0xf]
        %v230 = vld [vmem:[%s215 + $0x4] sm:$0xf]
        %v231 = vld [vmem:[%s215 + $0x8] sm:$0xf]
        %v232 = vld [vmem:[%s215 + $0xc] sm:$0xf]
        %v233 = vld [vmem:[%s218] sm:$0x1]
        %v235 = vlaneseq
        %v236 = vshrl.u32 %v235, 7
        %v237 = vsub.s32 0, %v236
        %v238 = vrot.slane %v233, %v237
        %v248 = vunpack.c.l.b16 %v221
        %v249 = vunpack.c.l.b16 %v222
        %v250 = vunpack.c.l.b16 %v223
        %v251 = vunpack.c.l.b16 %v224
        %v252 = vunpack.c.l.b16 %v225
        %v253 = vunpack.c.l.b16 %v226
        %v254 = vunpack.c.l.b16 %v227
        %v255 = vunpack.c.l.b16 %v228
        %v256 = vpack.c.b16 %v249, %v248
        %v257 = vpack.c.b16 %v251, %v250
        %v258 = vpack.c.b16 %v253, %v252
        %v259 = vpack.c.b16 %v255, %v254
        %v264 = vunpack.c.l.b16 %v229
        %v265 = vunpack.c.l.b16 %v230
        %v266 = vunpack.c.l.b16 %v231
        %v267 = vunpack.c.l.b16 %v232
        %v268 = vpack.c.b16 %v265, %v264
        %v269 = vpack.c.b16 %v267, %v266
        %vm272 = vcmask 261120
        %v274 = vsel %vm272, %v256, 0
        %v277 = vsel %vm272, %v257, 0
        %v280 = vsel %vm272, %v258, 0
        %v283 = vsel %vm272, %v259, 0
        %285 = vmatprep.subr.bf16.mxu0 0
        %286 = vmatpush1.bf16.msra.mxu0 0
        %287 = vmatprep.subr.bf16.mxu0 0
        %288 = vmatpush1.bf16.msra.mxu0 0
        %289 = vmatprep.subr.bf16.mxu0 0
        %290 = vmatpush1.bf16.msra.mxu0 0
        %291 = vmatprep.subr.bf16.mxu0 0
        %292 = vmatpush1.bf16.msra.mxu0 0
        %293 = vmatprep.subr.bf16.mxu0 0
        %294 = vmatpush1.bf16.msra.mxu0 0
        %295 = vmatprep.subr.bf16.mxu0 0
        %296 = vmatpush1.bf16.msra.mxu0 0
        %297 = vmatprep.subr.bf16.mxu0 0
        %298 = vmatpush1.bf16.msra.mxu0 %v269
        %299 = vmatprep.subr.bf16.mxu0 0
        %300 = vmatpush1.bf16.msra.mxu0 %v268
        %301 = vmatprep.subr.bf16.mxu0 0
        %302 = vmatpush2.bf16.msra.mxu0 0
        %303 = vmatprep.subr.bf16.mxu0 0
        %304 = vmatpush2.bf16.msra.mxu0 0
        %305 = vmatprep.subr.bf16.mxu0 0
        %306 = vmatpush2.bf16.msra.mxu0 0
        %307 = vmatprep.subr.bf16.mxu0 0
        %308 = vmatpush2.bf16.msra.mxu0 0
        %309 = vmatprep.subr.bf16.mxu0 0
        %310 = vmatpush2.bf16.msra.mxu0 0
        %311 = vmatprep.subr.bf16.mxu0 0
        %312 = vmatpush2.bf16.msra.mxu0 0
        %313 = vmatprep.subr.bf16.mxu0 0
        %314 = vmatpush2.bf16.msra.mxu0 0
        %315 = vmatprep.subr.bf16.mxu0 0
        %316 = vmatpush2.bf16.msra.mxu0 0
        %317 = vmatprep.mubr.bf16.mxu0 0
        %318 = vmatmul.mubr.bf16.gmra.mxu0 %v274
        %v319 = vpop.f32.mrf.mxu0
        %v320 = vadd.f32 %v238, %v319
        %v321 = vpop.f32.mrf.mxu0
        %v322 = vpop.f32.mrf.mxu0
        %v323 = vadd.f32 %v238, %v322
        %v324 = vpop.f32.mrf.mxu0
        %325 = vmatprep.mubr.bf16.mxu0 0
        %326 = vmatmul.mubr.bf16.gmra.mxu0 %v277
        %v327 = vpop.f32.mrf.mxu0
        %v328 = vadd.f32 %v238, %v327
        %v329 = vpop.f32.mrf.mxu0
        %v330 = vpop.f32.mrf.mxu0
        %v331 = vadd.f32 %v238, %v330
        %v332 = vpop.f32.mrf.mxu0
        %333 = vmatprep.mubr.bf16.mxu0 0
        %334 = vmatmul.mubr.bf16.gmra.mxu0 %v280
        %v335 = vpop.f32.mrf.mxu0
        %v336 = vadd.f32 %v238, %v335
        %v337 = vpop.f32.mrf.mxu0
        %v338 = vpop.f32.mrf.mxu0
        %v339 = vadd.f32 %v238, %v338
        %v340 = vpop.f32.mrf.mxu0
        %341 = vmatprep.mubr.bf16.mxu0 0
        %342 = vmatmul.mubr.bf16.gmra.mxu0 %v283
        %v343 = vpop.f32.mrf.mxu0
        %v344 = vadd.f32 %v238, %v343
        %v345 = vpop.f32.mrf.mxu0
        %v346 = vpop.f32.mrf.mxu0
        %v347 = vadd.f32 %v238, %v346
        %v348 = vpop.f32.mrf.mxu0
        %349 = vdwg.mxu0
        %v350 = vpack.c.bf16 %v323, %v320
        %v351 = vpack.c.bf16 %v331, %v328
        %v352 = vpack.c.bf16 %v339, %v336
        %v353 = vpack.c.bf16 %v347, %v344
        %v358 = vunpack.c.l.b16 %v350
        %v359 = vunpack.c.h.b16 %v350
        %v360 = vunpack.c.l.b16 %v351
        %v361 = vunpack.c.h.b16 %v351
        %v362 = vunpack.c.l.b16 %v352
        %v363 = vunpack.c.h.b16 %v352
        %v364 = vunpack.c.l.b16 %v353
        %v365 = vunpack.c.h.b16 %v353
        %v366 = vpack.c.b16 %v358, %v358
        %v367 = vpack.c.b16 %v359, %v359
        %v368 = vpack.c.b16 %v360, %v360
        %v369 = vpack.c.b16 %v361, %v361
        %v370 = vpack.c.b16 %v362, %v362
        %v371 = vpack.c.b16 %v363, %v363
        %v372 = vpack.c.b16 %v364, %v364
        %v373 = vpack.c.b16 %v365, %v365
        %382 = vst [vmem:[%s204] sm:$0xf] %v366
        %383 = vst [vmem:[%s204 + $0x4] sm:$0xf] %v367
        %384 = vst [vmem:[%s204 + $0x8] sm:$0xf] %v368
        %385 = vst [vmem:[%s204 + $0xc] sm:$0xf] %v369
        %386 = vst [vmem:[%s204 + $0x10] sm:$0xf] %v370
        %387 = vst [vmem:[%s204 + $0x14] sm:$0xf] %v371
        %388 = vst [vmem:[%s204 + $0x18] sm:$0xf] %v372
        %389 = vst [vmem:[%s204 + $0x1c] sm:$0xf] %v373
        %s390 = sand.u32 %s117, 1
        %s391 = scalar_lea.sflag [#allocation3], %s390
        %s392 = sand.u32 %s117, 1
        %s393 = smul.addr %s392, 32
        %s394 = scalar_lea.vmem [#allocation2], %s393
        // Predicated region
        $region33: #{tpu_custom_call.1} parent=31 // pred_check
          %p395 = pneg %p127
        $region34: #{tpu_custom_call.1} parent=31 // pred_check_branch
          %397 = sbr.rel (%p395) target = $region36
        $region35: #{tpu_custom_call.1} parent=31 // pred_region
          %s398 = smul.u32 8, %s21
          %s400 = ssub.s32 512, 512
          %401 = vsyncadd %s391, %s400
          %s402 = smul.addr %s22, 8
          %s403 = sadd.s32 %s398, %s402
          %s404 = smul.addr %s403, 64
          %s405 = scalar_lea.hbm %s3, %s404
          %s406 = sshll.u32 %s394, 4
          %s407 = int_to_ptr.vmem [resolvable:$true] %s406
          %412 = dma.vmem_to_hbm [thread:$0]  %s407, 512, %s405, %s391, 64, 64, 4
        $region36: #{tpu_custom_call.1} parent=31 // pred_fallthru
          _
      $region32: #{tpu_custom_call.1} parent=5 // pred_fallthru
        _
      %p413 = scmp.le.s32.totalorder 2, %s12
      // Predicated region
      $region37: #{tpu_custom_call.1} parent=5 // pred_check
        %p414 = pneg %p413
      $region38: #{tpu_custom_call.1} parent=5 // pred_check_branch
        %416 = sbr.rel (%p414) target = $region40
      $region39: #{tpu_custom_call.1} parent=5 // pred_region
        %s417 = ssub.s32 %s12, 2
        // Predicated region
        $region41: #{tpu_custom_call.1} parent=39 // pred_check
          %p418 = pneg %p133
        $region42: #{tpu_custom_call.1} parent=39 // pred_check_branch
          %420 = sbr.rel (%p418) target = $region44
        $region43: #{tpu_custom_call.1} parent=39 // pred_region
          %s421 = sand.u32 %s118, 1
          %s422 = scalar_lea.sflag [#allocation3], %s421
          %s423 = sand.u32 %s118, 1
          %s424 = smul.addr %s423, 32
          %s425 = scalar_lea.vmem [#allocation2], %s424
          %426 = dma.done %s422, 512
        $region44: #{tpu_custom_call.1} parent=39 // pred_fallthru
          _
      $region40: #{tpu_custom_call.1} parent=5 // pred_fallthru
        _
    $region6: #{tpu_custom_call.1} parent=1 // loop_footer
      %s16 = sadd.s32 1, %s12
    $region7: #{tpu_custom_call.1} parent=1 // loop_footer_branch
      %11 = sbr.rel target = $region3
    $region8: #{tpu_custom_call.1} parent=1 // loop_exit
      _
    %427 = vsyncpa [#allocation3], 1
    %s428 = scalar_lea.sflag [#allocation3], 1
    %429 = vsyncpa %s428, 1

</llo_original>
